<compile_context>
chip_gen: v7x
topology: tpu7x:2x2x1
jax: 0.10.0
libtpu: 0.0.40
codegen_flags: <defaults>
</compile_context>

<pallas_src>
import functools

import jax
import jax.numpy as jnp
from jax.experimental import pallas as pl
from jax.experimental.pallas import tpu as pltpu


def _round_up(x, m):
    return ((x + m - 1) // m) * m


def _sublane_tile(dtype):
    # Packed sublane tile: f32 -> 8, bf16 -> 16, int8/fp8 -> 32.
    return max(8, 32 // max(1, jnp.dtype(dtype).itemsize))


def _chip_params():
    """Return (output-block byte target, scoped-VMEM ceiling we are willing to request)."""
    try:
        kind = jax.devices()[0].device_kind.lower()
    except Exception:
        kind = ""
    if "v7" in kind:
        return 6 << 20, 48 << 20      # 64 MiB physical VMEM per TC -> stay well under
    if "v6" in kind:
        return 3 << 20, 96 << 20      # 128 MiB physical
    if "v5" in kind:
        return 2 << 20, 96 << 20      # 128 MiB physical
    return 3 << 20, 40 << 20          # unknown chip: conservative


def _pick_block_rows(n_rows, w, K, itemsize, tile, target_bytes, block_budget_bytes):
    """Rows per block: ~target_bytes of output per block, multiple of the dtype sublane tile,
    >= 2 grid steps when possible, and double-buffered blocks within the VMEM budget."""
    out_row = K * itemsize
    in_row = w * itemsize
    cap = max(tile, (target_bytes // max(1, out_row)) // tile * tile)
    if n_rows <= cap:
        # Small/medium inputs: still emit >= 2 grid steps (pipelining + v7x megacore sharding).
        tm = _round_up((n_rows + 1) // 2, tile)
        tm = min(tm, _round_up(n_rows, tile))
    else:
        # Exact divisor only if it keeps blocks >= cap/2; otherwise ragged last block.
        tm = cap
        lo = max(tile, (cap // 2) // tile * tile)
        for cand in range(cap, lo - 1, -tile):
            if n_rows % cand == 0:
                tm = cand
                break
    # VMEM guard: double-buffered (input + output) blocks must fit the per-chip budget.
    per_row_2buf = 2 * (in_row + out_row)
    max_tm = max(tile, (block_budget_bytes // max(1, per_row_2buf)) // tile * tile)
    return max(tile, min(tm, max_tm))


def _make_kernel(mode, w, x_scale, y_scale):
    W = w * x_scale
    K = y_scale * W

    if mode == "reshape":
        # Build the whole (tm, K) output row in-register and issue one dense, aligned store.
        def kernel(x_ref, o_ref):
            x = x_ref[...]                                            # (tm, w)
            tm = x.shape[0]
            full = jnp.broadcast_to(x[:, None, :, None],
                                    (tm, y_scale, w, x_scale)).reshape(tm, K)
            o_ref[...] = full
        return kernel

    if mode == "strided":
        # O(x_scale * y_scale) stores: for each (dy, dx) a lane-strided store of the raw rows.
        def kernel(x_ref, o_ref):
            x = x_ref[...]                                            # (tm, w)
            for dy in range(y_scale):
                if x_scale == 1:
                    o_ref[:, dy * W:(dy + 1) * W] = x
                else:
                    for dx in range(x_scale):
                        o_ref[:, pl.ds(dy * W + dx, w, stride=x_scale)] = x
        return kernel

    # mode == "select": guaranteed-to-lower last resort (iota / compare / where only).
    def kernel(x_ref, o_ref):
        x = x_ref[...]                                                # (tm, w)
        tm = x.shape[0]
        if x_scale == 1:
            xw = x
        else:
            lane = jax.lax.broadcasted_iota(jnp.int32, (tm, W), dimension=1)
            xw = jnp.broadcast_to(x[:, :1], (tm, W))
            for j in range(1, w):
                xw = jnp.where(lane >= j * x_scale, x[:, j:j + 1], xw)
        for dy in range(y_scale):
            o_ref[:, dy * W:(dy + 1) * W] = xw
    return kernel


def _build_call(n_rows, w, x_scale, y_scale, dtype, tm, mode, vmem_limit_bytes):
    K = y_scale * x_scale * w
    itemsize = jnp.dtype(dtype).itemsize
    kernel = _make_kernel(mode, w, x_scale, y_scale)
    cp_kwargs = dict(dimension_semantics=("parallel",))
    if vmem_limit_bytes is not None:
        cp_kwargs["vmem_limit_bytes"] = int(vmem_limit_bytes)
    return pl.pallas_call(
        kernel,
        out_shape=jax.ShapeDtypeStruct((n_rows, K), dtype),
        grid=(pl.cdiv(n_rows, tm),),
        in_specs=[pl.BlockSpec((tm, w), lambda i: (i, 0))],
        out_specs=pl.BlockSpec((tm, K), lambda i: (i, 0)),
        compiler_params=pltpu.CompilerParams(**cp_kwargs),
        cost_estimate=pl.CostEstimate(
            flops=0, transcendentals=0,
            bytes_accessed=n_rows * (w + K) * itemsize),
    )


@functools.lru_cache(maxsize=None)
def _pick_mode(n_rows, w, x_scale, y_scale, dtype_name, tm, vmem_limit_bytes):
    """Probe once per real signature (AOT compile) which stretch construction Mosaic accepts:
    broadcast+reshape single-store > O(xs*ys) strided stores > select ladder."""
    dtype = jnp.dtype(dtype_name)
    if x_scale == 1 and y_scale == 1:
        return "reshape"                                              # plain copy, always lowers
    for mode in ("reshape", "strided"):
        call = _build_call(n_rows, w, x_scale, y_scale, dtype, tm, mode, vmem_limit_bytes)
        try:
            jax.jit(call).lower(jax.ShapeDtypeStruct((n_rows, w), dtype)).compile()
            return mode
        except Exception:
            continue
    return "select"                                                   # guaranteed last resort


def stretch2d(x, x_scale: int, y_scale: int, *, block_target_bytes=None):
    """Pallas Stretch2d.forward: (b, c, h, w) -> (b, c, h*y_scale, w*x_scale)."""
    b, c, h, w = x.shape
    K = y_scale * x_scale * w
    N = b * c * h
    itemsize = x.dtype.itemsize
    tile = _sublane_tile(x.dtype)

    target, vmem_ceiling = _chip_params()
    if block_target_bytes is not None:
        target = block_target_bytes
    block_budget = max(8 << 20, vmem_ceiling - (8 << 20))

    tm = _pick_block_rows(N, w, K, itemsize, tile, target, block_budget)

    needed = 2 * tm * (w + K) * itemsize        # double-buffered in + out blocks
    vmem_limit = None
    if needed > (12 << 20):
        # TODO(synk): if a single tile-row block still exceeds the v7x budget, a second grid
        # axis tiling K in 128-lane multiples would be required; not needed for these shapes.
        vmem_limit = min(vmem_ceiling, _round_up(needed + (2 << 20), 1 << 20))

    mode = _pick_mode(N, w, x_scale, y_scale, x.dtype.name, tm, vmem_limit)
    call = _build_call(N, w, x_scale, y_scale, x.dtype, tm, mode, vmem_limit)

    x2 = x.reshape(N, w)                                             # pure metadata
    out2 = call(x2)
    return out2.reshape(b, c, h * y_scale, w * x_scale)              # pure metadata


if __name__ == "__main__":
    key = jax.random.PRNGKey(0)
    k1, k2, k3, k4 = jax.random.split(key, 4)

    def ref_stretch(x, xs, ys):
        return jnp.repeat(jnp.repeat(x, ys, axis=2), xs, axis=3)

    # Case 1: both scales > 1 (width interleave + height copies), exact multi-block grid.
    x1 = jax.random.normal(k1, (2, 4, 16, 16), dtype=jnp.float32)
    o1 = jax.block_until_ready(stretch2d(x1, 4, 2))
    assert o1.shape == (2, 4, 32, 64) and o1.dtype == x1.dtype
    assert bool(jnp.array_equal(o1, ref_stretch(x1, 4, 2))), "case 1 mismatch"

    # Case 2: WaveRNN-style time upsample (y_scale == 1, W % 128 != 0).
    x2 = jax.random.normal(k2, (1, 4, 32, 24), dtype=jnp.float32)
    o2 = jax.block_until_ready(stretch2d(x2, 11, 1))
    assert o2.shape == (1, 4, 32, 264) and o2.dtype == x2.dtype
    assert bool(jnp.array_equal(o2, ref_stretch(x2, 11, 1))), "case 2 mismatch"

    # Case 3: ragged last block (N = 15 is not a multiple of the row tile).
    x3 = jax.random.normal(k3, (1, 3, 5, 16), dtype=jnp.float32)
    o3 = jax.block_until_ready(stretch2d(x3, 2, 3))
    assert o3.shape == (1, 3, 15, 32)
    assert bool(jnp.array_equal(o3, ref_stretch(x3, 2, 3))), "case 3 mismatch"

    # Case 4: bf16 (16-row packed sublane tile) with a ragged last block.
    x4 = jax.random.normal(k4, (1, 2, 10, 24), dtype=jnp.bfloat16)
    o4 = jax.block_until_ready(stretch2d(x4, 3, 1))
    assert o4.shape == (1, 2, 10, 72) and o4.dtype == jnp.bfloat16
    assert bool(jnp.array_equal(o4, ref_stretch(x4, 3, 1))), "case 4 mismatch"

    print("KERNEL_OK")
</pallas_src>

<mosaic_0001>
module attributes {stable_mosaic.version = 11 : i64} {
  func.func @kernel(%arg0: i32, %arg1: memref<64x16xf32, #tpu.memory_space<vmem>>, %arg2: memref<64x128xf32, #tpu.memory_space<vmem>>) attributes {dimension_semantics = [#tpu.dimension_semantics<parallel>], iteration_bounds = array<i64: 2>, scalar_prefetch = 0 : i64, scratch_operands = 0 : i64, tpu.core_type = #tpu.core_type<tc>, window_params = [{transform_indices = @transform_0, window_bounds = array<i64: 64, 16>}, {transform_indices = @transform_1, window_bounds = array<i64: 64, 128>}]} {
    %c0 = arith.constant 0 : index
    %c0_0 = arith.constant 0 : index
    %0 = vector.load %arg1[%c0, %c0_0] : memref<64x16xf32, #tpu.memory_space<vmem>>, vector<64x16xf32>
    %1 = tpu.iota {dimensions = array<i32: 1>} : vector<64x64xi32>
    %2 = vector.extract_strided_slice %0 {offsets = [0, 0], sizes = [64, 1], strides = [1, 1]} : vector<64x16xf32> to vector<64x1xf32>
    %3 = vector.shape_cast %2 : vector<64x1xf32> to vector<64x1xf32>
    %4 = vector.broadcast %3 : vector<64x1xf32> to vector<64x64xf32>
    %c4_i32 = arith.constant 4 : i32
    %5 = vector.broadcast %c4_i32 : i32 to vector<64x64xi32>
    %6 = arith.cmpi sge, %1, %5 : vector<64x64xi32>
    %7 = vector.extract_strided_slice %0 {offsets = [0, 1], sizes = [64, 1], strides = [1, 1]} : vector<64x16xf32> to vector<64x1xf32>
    %8 = vector.shape_cast %7 : vector<64x1xf32> to vector<64x1xf32>
    %9 = vector.broadcast %8 : vector<64x1xf32> to vector<64x64xf32>
    %10 = arith.select %6, %9, %4 : vector<64x64xi1>, vector<64x64xf32>
    %c8_i32 = arith.constant 8 : i32
    %11 = vector.broadcast %c8_i32 : i32 to vector<64x64xi32>
    %12 = arith.cmpi sge, %1, %11 : vector<64x64xi32>
    %13 = vector.extract_strided_slice %0 {offsets = [0, 2], sizes = [64, 1], strides = [1, 1]} : vector<64x16xf32> to vector<64x1xf32>
    %14 = vector.shape_cast %13 : vector<64x1xf32> to vector<64x1xf32>
    %15 = vector.broadcast %14 : vector<64x1xf32> to vector<64x64xf32>
    %16 = arith.select %12, %15, %10 : vector<64x64xi1>, vector<64x64xf32>
    %c12_i32 = arith.constant 12 : i32
    %17 = vector.broadcast %c12_i32 : i32 to vector<64x64xi32>
    %18 = arith.cmpi sge, %1, %17 : vector<64x64xi32>
    %19 = vector.extract_strided_slice %0 {offsets = [0, 3], sizes = [64, 1], strides = [1, 1]} : vector<64x16xf32> to vector<64x1xf32>
    %20 = vector.shape_cast %19 : vector<64x1xf32> to vector<64x1xf32>
    %21 = vector.broadcast %20 : vector<64x1xf32> to vector<64x64xf32>
    %22 = arith.select %18, %21, %16 : vector<64x64xi1>, vector<64x64xf32>
    %c16_i32 = arith.constant 16 : i32
    %23 = vector.broadcast %c16_i32 : i32 to vector<64x64xi32>
    %24 = arith.cmpi sge, %1, %23 : vector<64x64xi32>
    %25 = vector.extract_strided_slice %0 {offsets = [0, 4], sizes = [64, 1], strides = [1, 1]} : vector<64x16xf32> to vector<64x1xf32>
    %26 = vector.shape_cast %25 : vector<64x1xf32> to vector<64x1xf32>
    %27 = vector.broadcast %26 : vector<64x1xf32> to vector<64x64xf32>
    %28 = arith.select %24, %27, %22 : vector<64x64xi1>, vector<64x64xf32>
    %c20_i32 = arith.constant 20 : i32
    %29 = vector.broadcast %c20_i32 : i32 to vector<64x64xi32>
    %30 = arith.cmpi sge, %1, %29 : vector<64x64xi32>
    %31 = vector.extract_strided_slice %0 {offsets = [0, 5], sizes = [64, 1], strides = [1, 1]} : vector<64x16xf32> to vector<64x1xf32>
    %32 = vector.shape_cast %31 : vector<64x1xf32> to vector<64x1xf32>
    %33 = vector.broadcast %32 : vector<64x1xf32> to vector<64x64xf32>
    %34 = arith.select %30, %33, %28 : vector<64x64xi1>, vector<64x64xf32>
    %c24_i32 = arith.constant 24 : i32
    %35 = vector.broadcast %c24_i32 : i32 to vector<64x64xi32>
    %36 = arith.cmpi sge, %1, %35 : vector<64x64xi32>
    %37 = vector.extract_strided_slice %0 {offsets = [0, 6], sizes = [64, 1], strides = [1, 1]} : vector<64x16xf32> to vector<64x1xf32>
    %38 = vector.shape_cast %37 : vector<64x1xf32> to vector<64x1xf32>
    %39 = vector.broadcast %38 : vector<64x1xf32> to vector<64x64xf32>
    %40 = arith.select %36, %39, %34 : vector<64x64xi1>, vector<64x64xf32>
    %c28_i32 = arith.constant 28 : i32
    %41 = vector.broadcast %c28_i32 : i32 to vector<64x64xi32>
    %42 = arith.cmpi sge, %1, %41 : vector<64x64xi32>
    %43 = vector.extract_strided_slice %0 {offsets = [0, 7], sizes = [64, 1], strides = [1, 1]} : vector<64x16xf32> to vector<64x1xf32>
    %44 = vector.shape_cast %43 : vector<64x1xf32> to vector<64x1xf32>
    %45 = vector.broadcast %44 : vector<64x1xf32> to vector<64x64xf32>
    %46 = arith.select %42, %45, %40 : vector<64x64xi1>, vector<64x64xf32>
    %c32_i32 = arith.constant 32 : i32
    %47 = vector.broadcast %c32_i32 : i32 to vector<64x64xi32>
    %48 = arith.cmpi sge, %1, %47 : vector<64x64xi32>
    %49 = vector.extract_strided_slice %0 {offsets = [0, 8], sizes = [64, 1], strides = [1, 1]} : vector<64x16xf32> to vector<64x1xf32>
    %50 = vector.shape_cast %49 : vector<64x1xf32> to vector<64x1xf32>
    %51 = vector.broadcast %50 : vector<64x1xf32> to vector<64x64xf32>
    %52 = arith.select %48, %51, %46 : vector<64x64xi1>, vector<64x64xf32>
    %c36_i32 = arith.constant 36 : i32
    %53 = vector.broadcast %c36_i32 : i32 to vector<64x64xi32>
    %54 = arith.cmpi sge, %1, %53 : vector<64x64xi32>
    %55 = vector.extract_strided_slice %0 {offsets = [0, 9], sizes = [64, 1], strides = [1, 1]} : vector<64x16xf32> to vector<64x1xf32>
    %56 = vector.shape_cast %55 : vector<64x1xf32> to vector<64x1xf32>
    %57 = vector.broadcast %56 : vector<64x1xf32> to vector<64x64xf32>
    %58 = arith.select %54, %57, %52 : vector<64x64xi1>, vector<64x64xf32>
    %c40_i32 = arith.constant 40 : i32
    %59 = vector.broadcast %c40_i32 : i32 to vector<64x64xi32>
    %60 = arith.cmpi sge, %1, %59 : vector<64x64xi32>
    %61 = vector.extract_strided_slice %0 {offsets = [0, 10], sizes = [64, 1], strides = [1, 1]} : vector<64x16xf32> to vector<64x1xf32>
    %62 = vector.shape_cast %61 : vector<64x1xf32> to vector<64x1xf32>
    %63 = vector.broadcast %62 : vector<64x1xf32> to vector<64x64xf32>
    %64 = arith.select %60, %63, %58 : vector<64x64xi1>, vector<64x64xf32>
    %c44_i32 = arith.constant 44 : i32
    %65 = vector.broadcast %c44_i32 : i32 to vector<64x64xi32>
    %66 = arith.cmpi sge, %1, %65 : vector<64x64xi32>
    %67 = vector.extract_strided_slice %0 {offsets = [0, 11], sizes = [64, 1], strides = [1, 1]} : vector<64x16xf32> to vector<64x1xf32>
    %68 = vector.shape_cast %67 : vector<64x1xf32> to vector<64x1xf32>
    %69 = vector.broadcast %68 : vector<64x1xf32> to vector<64x64xf32>
    %70 = arith.select %66, %69, %64 : vector<64x64xi1>, vector<64x64xf32>
    %c48_i32 = arith.constant 48 : i32
    %71 = vector.broadcast %c48_i32 : i32 to vector<64x64xi32>
    %72 = arith.cmpi sge, %1, %71 : vector<64x64xi32>
    %73 = vector.extract_strided_slice %0 {offsets = [0, 12], sizes = [64, 1], strides = [1, 1]} : vector<64x16xf32> to vector<64x1xf32>
    %74 = vector.shape_cast %73 : vector<64x1xf32> to vector<64x1xf32>
    %75 = vector.broadcast %74 : vector<64x1xf32> to vector<64x64xf32>
    %76 = arith.select %72, %75, %70 : vector<64x64xi1>, vector<64x64xf32>
    %c52_i32 = arith.constant 52 : i32
    %77 = vector.broadcast %c52_i32 : i32 to vector<64x64xi32>
    %78 = arith.cmpi sge, %1, %77 : vector<64x64xi32>
    %79 = vector.extract_strided_slice %0 {offsets = [0, 13], sizes = [64, 1], strides = [1, 1]} : vector<64x16xf32> to vector<64x1xf32>
    %80 = vector.shape_cast %79 : vector<64x1xf32> to vector<64x1xf32>
    %81 = vector.broadcast %80 : vector<64x1xf32> to vector<64x64xf32>
    %82 = arith.select %78, %81, %76 : vector<64x64xi1>, vector<64x64xf32>
    %c56_i32 = arith.constant 56 : i32
    %83 = vector.broadcast %c56_i32 : i32 to vector<64x64xi32>
    %84 = arith.cmpi sge, %1, %83 : vector<64x64xi32>
    %85 = vector.extract_strided_slice %0 {offsets = [0, 14], sizes = [64, 1], strides = [1, 1]} : vector<64x16xf32> to vector<64x1xf32>
    %86 = vector.shape_cast %85 : vector<64x1xf32> to vector<64x1xf32>
    %87 = vector.broadcast %86 : vector<64x1xf32> to vector<64x64xf32>
    %88 = arith.select %84, %87, %82 : vector<64x64xi1>, vector<64x64xf32>
    %c60_i32 = arith.constant 60 : i32
    %89 = vector.broadcast %c60_i32 : i32 to vector<64x64xi32>
    %90 = arith.cmpi sge, %1, %89 : vector<64x64xi32>
    %91 = vector.extract_strided_slice %0 {offsets = [0, 15], sizes = [64, 1], strides = [1, 1]} : vector<64x16xf32> to vector<64x1xf32>
    %92 = vector.shape_cast %91 : vector<64x1xf32> to vector<64x1xf32>
    %93 = vector.broadcast %92 : vector<64x1xf32> to vector<64x64xf32>
    %94 = arith.select %90, %93, %88 : vector<64x64xi1>, vector<64x64xf32>
    %c0_1 = arith.constant 0 : index
    %c0_2 = arith.constant 0 : index
    %95 = vector.load %arg2[%c0_1, %c0_2] : memref<64x128xf32, #tpu.memory_space<vmem>>, vector<64x64xf32>
    tpu.vector_store %arg2[%c0_1, %c0_2], %94 {strides = array<i32>} : memref<64x128xf32, #tpu.memory_space<vmem>>, vector<64x64xf32>,
    %c0_3 = arith.constant 0 : index
    %c64 = arith.constant 64 : index
    %96 = vector.load %arg2[%c0_3, %c64] : memref<64x128xf32, #tpu.memory_space<vmem>>, vector<64x64xf32>
    tpu.vector_store %arg2[%c0_3, %c64], %94 {strides = array<i32>} : memref<64x128xf32, #tpu.memory_space<vmem>>, vector<64x64xf32>,
    return
  }
  func.func @transform_0(%arg0: i32) -> (i32, i32) {
    %c0_i32 = arith.constant 0 : i32
    %c0_i32_0 = arith.constant 0 : i32
    return %arg0, %c0_i32 : i32, i32
  }
  func.func @transform_1(%arg0: i32) -> (i32, i32) {
    %c0_i32 = arith.constant 0 : i32
    %c0_i32_0 = arith.constant 0 : i32
    return %arg0, %c0_i32 : i32, i32
  }
}

</mosaic_0001>

<llo_original>
// kernel: tpu_custom_call.1
$region0: #{tpu_custom_call.1}
  #allocation0 [shape = 'u32[]', space=smem, size = 0x4, offset = 0x4, fixed_abs, tag = 'smem constant byte address 0x4 - core index']
  #allocation1 [shape = 'u32[144,128]{1,0:T(1,128)}', space=vmem, size = 0x12000, scoped, tag = 'internal scratch']
  %s0 = inlined_call_operand.vmem [shape: f32[128,16], index: 0, kind: input, shape index: {}]
  %s1 = inlined_call_operand.hbm [shape: f32[128,128], index: 1, kind: output, shape index: {}]
  %s2 = sld [smem:[#allocation0]]
  $region37: #{tpu_custom_call.1} parent=0
    _
  %s4 = ssub.s32 1, %s2
  %s5 = scalar_select 0, %s4, %s2
  $region1: #{tpu_custom_call.1} parent=0
    #allocation2 [shape = 'u8[65536]{0}', space=vmem, size = 0x10000, scoped, tag = 'output window, operand 0']
    #allocation3 [shape = 's32[2]{0}', space=sflag, size = 0x8, scoped, tag = 'scoped memory for tpu_custom_call.1']
    %6 = vsyncpa [#allocation3], 0
    %s7 = scalar_lea.sflag [#allocation3], 1
    %8 = vsyncpa %s7, 0
    loop: start=0, step=1, limit=4
    $region2: #{tpu_custom_call.1} parent=1 // loop_pre_header
      _
    $region3: #{tpu_custom_call.1} parent=1 // loop_header
      %s10 = sphi 0, %s14
      %p11 = scmp.ge.s32.totalorder %s10, 4
      %s20 = sphi 0, %s22
      %s23 = sphi 0, %s20
      %s24 = sphi 0, %s23
      %s40 = sphi 0, %s24
      %s46 = sphi 0, %s48
      %s49 = sphi 0, %s46
      %s50 = sphi 0, %s49
      %s66 = sphi 0, %s50
    $region4: #{tpu_custom_call.1} parent=1 // loop_header_branch
      %13 = sbr.rel (%p11) target = $region8
    $region5: #{tpu_custom_call.1} parent=1 // loop_body
      %s15 = ssub.s32 %s10, 1
      %s16 = ssub.s32 %s10, 2
      %s17 = sadd.s32 %s10, 1
      %s18 = ssub.s32 %s10, %s17
      %p19 = scmp.eq.s32.totalorder %s18, 0
      %s21 = sadd.s32 %s20, 1
      %s22 = scalar_select %p19, %s20, %s21
      %p25 = pneg %p19
      %p26 = scmp.eq.s32.totalorder %s10, 1
      %p27 = por %p25, %p26
      %p28 = scmp.ne.s32.totalorder %s20, %s23
      %p29 = scmp.eq.s32.totalorder %s10, 0
      %p30 = por %p28, %p29
      %p31 = scmp.ne.s32.totalorder %s20, %s23
      %p32 = scmp.eq.s32.totalorder %s15, 1
      %p33 = por %p31, %p32
      %p34 = scmp.ne.s32.totalorder %s23, %s24
      %p35 = scmp.eq.s32.totalorder %s15, 0
      %p36 = por %p34, %p35
      %p37 = scmp.ne.s32.totalorder %s23, %s24
      %p38 = scmp.eq.s32.totalorder %s16, 1
      %p39 = por %p37, %p38
      %p41 = scmp.ne.s32.totalorder %s24, %s40
      %p42 = scmp.eq.s32.totalorder %s16, 0
      %p43 = por %p41, %p42
      %s44 = ssub.s32 %s10, %s17
      %p45 = scmp.eq.s32.totalorder %s44, 0
      %s47 = sadd.s32 %s46, 1
      %s48 = scalar_select %p45, %s46, %s47
      %p51 = pneg %p45
      %p52 = scmp.eq.s32.totalorder %s10, 1
      %p53 = por %p51, %p52
      %p54 = scmp.ne.s32.totalorder %s46, %s49
      %p55 = scmp.eq.s32.totalorder %s10, 0
      %p56 = por %p54, %p55
      %p57 = scmp.ne.s32.totalorder %s46, %s49
      %p58 = scmp.eq.s32.totalorder %s15, 1
      %p59 = por %p57, %p58
      %p60 = scmp.ne.s32.totalorder %s49, %s50
      %p61 = scmp.eq.s32.totalorder %s15, 0
      %p62 = por %p60, %p61
      %p63 = scmp.ne.s32.totalorder %s49, %s50
      %p64 = scmp.eq.s32.totalorder %s16, 1
      %p65 = por %p63, %p64
      %p67 = scmp.ne.s32.totalorder %s50, %s66
      %p68 = scmp.eq.s32.totalorder %s16, 0
      %p69 = por %p67, %p68
      %p70 = scmp.le.s32.totalorder 1, %s10
      %p71 = scmp.lt.s32.totalorder %s10, 3
      %p72 = pnand %p70, %p71
      %p73 = pneg %p72
      // Predicated region
      $region9: #{tpu_custom_call.1} parent=5 // pred_check
        _
      $region10: #{tpu_custom_call.1} parent=5 // pred_check_branch
        %75 = sbr.rel (%p72) target = $region12
      $region11: #{tpu_custom_call.1} parent=5 // pred_region
        %s76 = ssub.s32 %s10, 1
      $region12: #{tpu_custom_call.1} parent=5 // pred_fallthru
        _
      %p77 = scmp.lt.s32.totalorder %s10, 2
      // Predicated region
      $region13: #{tpu_custom_call.1} parent=5 // pred_check
        %p78 = pneg %p77
      $region14: #{tpu_custom_call.1} parent=5 // pred_check_branch
        %80 = sbr.rel (%p78) target = $region16
      $region15: #{tpu_custom_call.1} parent=5 // pred_region
        // Predicated region
        $region17: #{tpu_custom_call.1} parent=15 // pred_check
          %p81 = pneg %p30
        $region18: #{tpu_custom_call.1} parent=15 // pred_check_branch
          %83 = sbr.rel (%p81) target = $region20
        $region19: #{tpu_custom_call.1} parent=15 // pred_region
          %s84 = smul.u32 8, %s10
          %p85 = scmp.lt.s32.totalorder %s84, 15
          %s86 = scalar_select %p85, %s84, 15
          %s87 = smul.addr %s86, 8
          %s88 = scalar_lea.vmem %s0, %s87
          %s89 = smul.u32 8, %s10
        $region20: #{tpu_custom_call.1} parent=15 // pred_fallthru
          _
      $region16: #{tpu_custom_call.1} parent=5 // pred_fallthru
        _
      %p90 = scmp.le.s32.totalorder 1, %s10
      %p91 = scmp.lt.s32.totalorder %s10, 3
      %p92 = pnand %p90, %p91
      %p93 = pneg %p92
      // Predicated region
      $region21: #{tpu_custom_call.1} parent=5 // pred_check
        _
      $region22: #{tpu_custom_call.1} parent=5 // pred_check_branch
        %95 = sbr.rel (%p92) target = $region24
      $region23: #{tpu_custom_call.1} parent=5 // pred_region
        %s96 = ssub.s32 %s10, 1
        %s97 = smul.u32 8, %s15
        %p98 = scmp.lt.s32.totalorder %s97, 15
        %s99 = scalar_select %p98, %s97, 15
        %s100 = smul.addr %s99, 8
        %s101 = scalar_lea.vmem %s0, %s100
        %p102 = pneg %p36
        %p103 = pneg %p33
        %p104 = pneg %p62
        %p105 = pneg %p59
        %s106 = sand.u32 %s49, 1
        %s107 = scalar_lea.sflag [#allocation3], %s106
        %s108 = sand.u32 %s49, 1
        %s109 = smul.addr %s108, 64
        %s110 = scalar_lea.vmem [#allocation2], %s109
        %s111 = smul.u32 8, %s15
        %p112 = scmp.lt.s32.totalorder %s111, 15
        %s113 = scalar_select %p112, %s111, 15
        %s114 = smul.addr %s113, 8
        %s115 = scalar_lea.vmem %s0, %s114
        %s116 = smul.u32 8, %s15
        %s117 = smul.u32 8, %s15
        %v118 = vld [vmem:[%s115] sm:$0xff]
        %v119 = vld [vmem:[%s115 + $0x8] sm:$0xff]
        %v120 = vld [vmem:[%s115 + $0x10] sm:$0xff]
        %v121 = vld [vmem:[%s115 + $0x18] sm:$0xff]
        %v122 = vld [vmem:[%s115 + $0x20] sm:$0xff]
        %v123 = vld [vmem:[%s115 + $0x28] sm:$0xff]
        %v124 = vld [vmem:[%s115 + $0x30] sm:$0xff]
        %v125 = vld [vmem:[%s115 + $0x38] sm:$0xff]
        %v126 = vlaneseq
        %v127 = vand.u32 %v126, 127
        %129 = vset.pattern.permute.xlu0 0
        %130 = vperm.xlu0 %129, %v118
        %v131 = vpop.permute.xlu0 %130
        %134 = vset.pattern.permute.xlu0 0
        %135 = vperm.xlu0 %134, %v119
        %v136 = vpop.permute.xlu0 %135
        %139 = vset.pattern.permute.xlu0 0
        %140 = vperm.xlu0 %139, %v120
        %v141 = vpop.permute.xlu0 %140
        %144 = vset.pattern.permute.xlu0 0
        %145 = vperm.xlu0 %144, %v121
        %v146 = vpop.permute.xlu0 %145
        %149 = vset.pattern.permute.xlu0 0
        %150 = vperm.xlu0 %149, %v122
        %v151 = vpop.permute.xlu0 %150
        %154 = vset.pattern.permute.xlu0 0
        %155 = vperm.xlu0 %154, %v123
        %v156 = vpop.permute.xlu0 %155
        %159 = vset.pattern.permute.xlu0 0
        %160 = vperm.xlu0 %159, %v124
        %v161 = vpop.permute.xlu0 %160
        %164 = vset.pattern.permute.xlu0 0
        %165 = vperm.xlu0 %164, %v125
        %v166 = vpop.permute.xlu0 %165
        %vm168 = vcmp.ge.s32.totalorder %v127, 4
        %169 = vset.pattern.permute.xlu0 1
        %170 = vperm.xlu0 %169, %v118
        %v171 = vpop.permute.xlu0 %170
        %173 = vset.pattern.permute.xlu0 1
        %174 = vperm.xlu0 %173, %v119
        %v175 = vpop.permute.xlu0 %174
        %177 = vset.pattern.permute.xlu0 1
        %178 = vperm.xlu0 %177, %v120
        %v179 = vpop.permute.xlu0 %178
        %181 = vset.pattern.permute.xlu0 1
        %182 = vperm.xlu0 %181, %v121
        %v183 = vpop.permute.xlu0 %182
        %185 = vset.pattern.permute.xlu0 1
        %186 = vperm.xlu0 %185, %v122
        %v187 = vpop.permute.xlu0 %186
        %189 = vset.pattern.permute.xlu0 1
        %190 = vperm.xlu0 %189, %v123
        %v191 = vpop.permute.xlu0 %190
        %193 = vset.pattern.permute.xlu0 1
        %194 = vperm.xlu0 %193, %v124
        %v195 = vpop.permute.xlu0 %194
        %197 = vset.pattern.permute.xlu0 1
        %198 = vperm.xlu0 %197, %v125
        %v199 = vpop.permute.xlu0 %198
        %v201 = vsel %vm168, %v171, %v131
        %v202 = vsel %vm168, %v175, %v136
        %v203 = vsel %vm168, %v179, %v141
        %v204 = vsel %vm168, %v183, %v146
        %v205 = vsel %vm168, %v187, %v151
        %v206 = vsel %vm168, %v191, %v156
        %v207 = vsel %vm168, %v195, %v161
        %v208 = vsel %vm168, %v199, %v166
        %vm209 = vcmp.ge.s32.totalorder %v127, 8
        %210 = vset.pattern.permute.xlu0 2
        %211 = vperm.xlu0 %210, %v118
        %v212 = vpop.permute.xlu0 %211
        %214 = vset.pattern.permute.xlu0 2
        %215 = vperm.xlu0 %214, %v119
        %v216 = vpop.permute.xlu0 %215
        %218 = vset.pattern.permute.xlu0 2
        %219 = vperm.xlu0 %218, %v120
        %v220 = vpop.permute.xlu0 %219
        %222 = vset.pattern.permute.xlu0 2
        %223 = vperm.xlu0 %222, %v121
        %v224 = vpop.permute.xlu0 %223
        %226 = vset.pattern.permute.xlu0 2
        %227 = vperm.xlu0 %226, %v122
        %v228 = vpop.permute.xlu0 %227
        %230 = vset.pattern.permute.xlu0 2
        %231 = vperm.xlu0 %230, %v123
        %v232 = vpop.permute.xlu0 %231
        %234 = vset.pattern.permute.xlu0 2
        %235 = vperm.xlu0 %234, %v124
        %v236 = vpop.permute.xlu0 %235
        %238 = vset.pattern.permute.xlu0 2
        %239 = vperm.xlu0 %238, %v125
        %v240 = vpop.permute.xlu0 %239
        %v242 = vsel %vm209, %v212, %v201
        %v243 = vsel %vm209, %v216, %v202
        %v244 = vsel %vm209, %v220, %v203
        %v245 = vsel %vm209, %v224, %v204
        %v246 = vsel %vm209, %v228, %v205
        %v247 = vsel %vm209, %v232, %v206
        %v248 = vsel %vm209, %v236, %v207
        %v249 = vsel %vm209, %v240, %v208
        %vm250 = vcmp.ge.s32.totalorder %v127, 12
        %251 = vset.pattern.permute.xlu0 3
        %252 = vperm.xlu0 %251, %v118
        %v253 = vpop.permute.xlu0 %252
        %255 = vset.pattern.permute.xlu0 3
        %256 = vperm.xlu0 %255, %v119
        %v257 = vpop.permute.xlu0 %256
        %259 = vset.pattern.permute.xlu0 3
        %260 = vperm.xlu0 %259, %v120
        %v261 = vpop.permute.xlu0 %260
        %263 = vset.pattern.permute.xlu0 3
        %264 = vperm.xlu0 %263, %v121
        %v265 = vpop.permute.xlu0 %264
        %267 = vset.pattern.permute.xlu0 3
        %268 = vperm.xlu0 %267, %v122
        %v269 = vpop.permute.xlu0 %268
        %271 = vset.pattern.permute.xlu0 3
        %272 = vperm.xlu0 %271, %v123
        %v273 = vpop.permute.xlu0 %272
        %275 = vset.pattern.permute.xlu0 3
        %276 = vperm.xlu0 %275, %v124
        %v277 = vpop.permute.xlu0 %276
        %279 = vset.pattern.permute.xlu0 3
        %280 = vperm.xlu0 %279, %v125
        %v281 = vpop.permute.xlu0 %280
        %v283 = vsel %vm250, %v253, %v242
        %v284 = vsel %vm250, %v257, %v243
        %v285 = vsel %vm250, %v261, %v244
        %v286 = vsel %vm250, %v265, %v245
        %v287 = vsel %vm250, %v269, %v246
        %v288 = vsel %vm250, %v273, %v247
        %v289 = vsel %vm250, %v277, %v248
        %v290 = vsel %vm250, %v281, %v249
        %vm291 = vcmp.ge.s32.totalorder %v127, 16
        %292 = vset.pattern.permute.xlu0 4
        %293 = vperm.xlu0 %292, %v118
        %v294 = vpop.permute.xlu0 %293
        %296 = vset.pattern.permute.xlu0 4
        %297 = vperm.xlu0 %296, %v119
        %v298 = vpop.permute.xlu0 %297
        %300 = vset.pattern.permute.xlu0 4
        %301 = vperm.xlu0 %300, %v120
        %v302 = vpop.permute.xlu0 %301
        %304 = vset.pattern.permute.xlu0 4
        %305 = vperm.xlu0 %304, %v121
        %v306 = vpop.permute.xlu0 %305
        %308 = vset.pattern.permute.xlu0 4
        %309 = vperm.xlu0 %308, %v122
        %v310 = vpop.permute.xlu0 %309
        %312 = vset.pattern.permute.xlu0 4
        %313 = vperm.xlu0 %312, %v123
        %v314 = vpop.permute.xlu0 %313
        %316 = vset.pattern.permute.xlu0 4
        %317 = vperm.xlu0 %316, %v124
        %v318 = vpop.permute.xlu0 %317
        %320 = vset.pattern.permute.xlu0 4
        %321 = vperm.xlu0 %320, %v125
        %v322 = vpop.permute.xlu0 %321
        %v324 = vsel %vm291, %v294, %v283
        %v325 = vsel %vm291, %v298, %v284
        %v326 = vsel %vm291, %v302, %v285
        %v327 = vsel %vm291, %v306, %v286
        %v328 = vsel %vm291, %v310, %v287
        %v329 = vsel %vm291, %v314, %v288
        %v330 = vsel %vm291, %v318, %v289
        %v331 = vsel %vm291, %v322, %v290
        %vm332 = vcmp.ge.s32.totalorder %v127, 20
        %333 = vset.pattern.permute.xlu0 5
        %334 = vperm.xlu0 %333, %v118
        %v335 = vpop.permute.xlu0 %334
        %337 = vset.pattern.permute.xlu0 5
        %338 = vperm.xlu0 %337, %v119
        %v339 = vpop.permute.xlu0 %338
        %341 = vset.pattern.permute.xlu0 5
        %342 = vperm.xlu0 %341, %v120
        %v343 = vpop.permute.xlu0 %342
        %345 = vset.pattern.permute.xlu0 5
        %346 = vperm.xlu0 %345, %v121
        %v347 = vpop.permute.xlu0 %346
        %349 = vset.pattern.permute.xlu0 5
        %350 = vperm.xlu0 %349, %v122
        %v351 = vpop.permute.xlu0 %350
        %353 = vset.pattern.permute.xlu0 5
        %354 = vperm.xlu0 %353, %v123
        %v355 = vpop.permute.xlu0 %354
        %357 = vset.pattern.permute.xlu0 5
        %358 = vperm.xlu0 %357, %v124
        %v359 = vpop.permute.xlu0 %358
        %361 = vset.pattern.permute.xlu0 5
        %362 = vperm.xlu0 %361, %v125
        %v363 = vpop.permute.xlu0 %362
        %v365 = vsel %vm332, %v335, %v324
        %v366 = vsel %vm332, %v339, %v325
        %v367 = vsel %vm332, %v343, %v326
        %v368 = vsel %vm332, %v347, %v327
        %v369 = vsel %vm332, %v351, %v328
        %v370 = vsel %vm332, %v355, %v329
        %v371 = vsel %vm332, %v359, %v330
        %v372 = vsel %vm332, %v363, %v331
        %vm373 = vcmp.ge.s32.totalorder %v127, 24
        %374 = vset.pattern.permute.xlu0 6
        %375 = vperm.xlu0 %374, %v118
        %v376 = vpop.permute.xlu0 %375
        %378 = vset.pattern.permute.xlu0 6
        %379 = vperm.xlu0 %378, %v119
        %v380 = vpop.permute.xlu0 %379
        %382 = vset.pattern.permute.xlu0 6
        %383 = vperm.xlu0 %382, %v120
        %v384 = vpop.permute.xlu0 %383
        %386 = vset.pattern.permute.xlu0 6
        %387 = vperm.xlu0 %386, %v121
        %v388 = vpop.permute.xlu0 %387
        %390 = vset.pattern.permute.xlu0 6
        %391 = vperm.xlu0 %390, %v122
        %v392 = vpop.permute.xlu0 %391
        %394 = vset.pattern.permute.xlu0 6
        %395 = vperm.xlu0 %394, %v123
        %v396 = vpop.permute.xlu0 %395
        %398 = vset.pattern.permute.xlu0 6
        %399 = vperm.xlu0 %398, %v124
        %v400 = vpop.permute.xlu0 %399
        %402 = vset.pattern.permute.xlu0 6
        %403 = vperm.xlu0 %402, %v125
        %v404 = vpop.permute.xlu0 %403
        %v406 = vsel %vm373, %v376, %v365
        %v407 = vsel %vm373, %v380, %v366
        %v408 = vsel %vm373, %v384, %v367
        %v409 = vsel %vm373, %v388, %v368
        %v410 = vsel %vm373, %v392, %v369
        %v411 = vsel %vm373, %v396, %v370
        %v412 = vsel %vm373, %v400, %v371
        %v413 = vsel %vm373, %v404, %v372
        %vm414 = vcmp.ge.s32.totalorder %v127, 28
        %415 = vset.pattern.permute.xlu0 7
        %416 = vperm.xlu0 %415, %v118
        %v417 = vpop.permute.xlu0 %416
        %419 = vset.pattern.permute.xlu0 7
        %420 = vperm.xlu0 %419, %v119
        %v421 = vpop.permute.xlu0 %420
        %423 = vset.pattern.permute.xlu0 7
        %424 = vperm.xlu0 %423, %v120
        %v425 = vpop.permute.xlu0 %424
        %427 = vset.pattern.permute.xlu0 7
        %428 = vperm.xlu0 %427, %v121
        %v429 = vpop.permute.xlu0 %428
        %431 = vset.pattern.permute.xlu0 7
        %432 = vperm.xlu0 %431, %v122
        %v433 = vpop.permute.xlu0 %432
        %435 = vset.pattern.permute.xlu0 7
        %436 = vperm.xlu0 %435, %v123
        %v437 = vpop.permute.xlu0 %436
        %439 = vset.pattern.permute.xlu0 7
        %440 = vperm.xlu0 %439, %v124
        %v441 = vpop.permute.xlu0 %440
        %443 = vset.pattern.permute.xlu0 7
        %444 = vperm.xlu0 %443, %v125
        %v445 = vpop.permute.xlu0 %444
        %v447 = vsel %vm414, %v417, %v406
        %v448 = vsel %vm414, %v421, %v407
        %v449 = vsel %vm414, %v425, %v408
        %v450 = vsel %vm414, %v429, %v409
        %v451 = vsel %vm414, %v433, %v410
        %v452 = vsel %vm414, %v437, %v411
        %v453 = vsel %vm414, %v441, %v412
        %v454 = vsel %vm414, %v445, %v413
        %vm455 = vcmp.ge.s32.totalorder %v127, 32
        %456 = vset.pattern.permute.xlu0 8
        %457 = vperm.xlu0 %456, %v118
        %v458 = vpop.permute.xlu0 %457
        %460 = vset.pattern.permute.xlu0 8
        %461 = vperm.xlu0 %460, %v119
        %v462 = vpop.permute.xlu0 %461
        %464 = vset.pattern.permute.xlu0 8
        %465 = vperm.xlu0 %464, %v120
        %v466 = vpop.permute.xlu0 %465
        %468 = vset.pattern.permute.xlu0 8
        %469 = vperm.xlu0 %468, %v121
        %v470 = vpop.permute.xlu0 %469
        %472 = vset.pattern.permute.xlu0 8
        %473 = vperm.xlu0 %472, %v122
        %v474 = vpop.permute.xlu0 %473
        %476 = vset.pattern.permute.xlu0 8
        %477 = vperm.xlu0 %476, %v123
        %v478 = vpop.permute.xlu0 %477
        %480 = vset.pattern.permute.xlu0 8
        %481 = vperm.xlu0 %480, %v124
        %v482 = vpop.permute.xlu0 %481
        %484 = vset.pattern.permute.xlu0 8
        %485 = vperm.xlu0 %484, %v125
        %v486 = vpop.permute.xlu0 %485
        %v488 = vsel %vm455, %v458, %v447
        %v489 = vsel %vm455, %v462, %v448
        %v490 = vsel %vm455, %v466, %v449
        %v491 = vsel %vm455, %v470, %v450
        %v492 = vsel %vm455, %v474, %v451
        %v493 = vsel %vm455, %v478, %v452
        %v494 = vsel %vm455, %v482, %v453
        %v495 = vsel %vm455, %v486, %v454
        %vm496 = vcmp.ge.s32.totalorder %v127, 36
        %497 = vset.pattern.permute.xlu0 9
        %498 = vperm.xlu0 %497, %v118
        %v499 = vpop.permute.xlu0 %498
        %501 = vset.pattern.permute.xlu0 9
        %502 = vperm.xlu0 %501, %v119
        %v503 = vpop.permute.xlu0 %502
        %505 = vset.pattern.permute.xlu0 9
        %506 = vperm.xlu0 %505, %v120
        %v507 = vpop.permute.xlu0 %506
        %509 = vset.pattern.permute.xlu0 9
        %510 = vperm.xlu0 %509, %v121
        %v511 = vpop.permute.xlu0 %510
        %513 = vset.pattern.permute.xlu0 9
        %514 = vperm.xlu0 %513, %v122
        %v515 = vpop.permute.xlu0 %514
        %517 = vset.pattern.permute.xlu0 9
        %518 = vperm.xlu0 %517, %v123
        %v519 = vpop.permute.xlu0 %518
        %521 = vset.pattern.permute.xlu0 9
        %522 = vperm.xlu0 %521, %v124
        %v523 = vpop.permute.xlu0 %522
        %525 = vset.pattern.permute.xlu0 9
        %526 = vperm.xlu0 %525, %v125
        %v527 = vpop.permute.xlu0 %526
        %v529 = vsel %vm496, %v499, %v488
        %v530 = vsel %vm496, %v503, %v489
        %v531 = vsel %vm496, %v507, %v490
        %v532 = vsel %vm496, %v511, %v491
        %v533 = vsel %vm496, %v515, %v492
        %v534 = vsel %vm496, %v519, %v493
        %v535 = vsel %vm496, %v523, %v494
        %v536 = vsel %vm496, %v527, %v495
        %vm537 = vcmp.ge.s32.totalorder %v127, 40
        %538 = vset.pattern.permute.xlu0 10
        %539 = vperm.xlu0 %538, %v118
        %v540 = vpop.permute.xlu0 %539
        %542 = vset.pattern.permute.xlu0 10
        %543 = vperm.xlu0 %542, %v119
        %v544 = vpop.permute.xlu0 %543
        %546 = vset.pattern.permute.xlu0 10
        %547 = vperm.xlu0 %546, %v120
        %v548 = vpop.permute.xlu0 %547
        %550 = vset.pattern.permute.xlu0 10
        %551 = vperm.xlu0 %550, %v121
        %v552 = vpop.permute.xlu0 %551
        %554 = vset.pattern.permute.xlu0 10
        %555 = vperm.xlu0 %554, %v122
        %v556 = vpop.permute.xlu0 %555
        %558 = vset.pattern.permute.xlu0 10
        %559 = vperm.xlu0 %558, %v123
        %v560 = vpop.permute.xlu0 %559
        %562 = vset.pattern.permute.xlu0 10
        %563 = vperm.xlu0 %562, %v124
        %v564 = vpop.permute.xlu0 %563
        %566 = vset.pattern.permute.xlu0 10
        %567 = vperm.xlu0 %566, %v125
        %v568 = vpop.permute.xlu0 %567
        %v570 = vsel %vm537, %v540, %v529
        %v571 = vsel %vm537, %v544, %v530
        %v572 = vsel %vm537, %v548, %v531
        %v573 = vsel %vm537, %v552, %v532
        %v574 = vsel %vm537, %v556, %v533
        %v575 = vsel %vm537, %v560, %v534
        %v576 = vsel %vm537, %v564, %v535
        %v577 = vsel %vm537, %v568, %v536
        %vm578 = vcmp.ge.s32.totalorder %v127, 44
        %579 = vset.pattern.permute.xlu0 11
        %580 = vperm.xlu0 %579, %v118
        %v581 = vpop.permute.xlu0 %580
        %583 = vset.pattern.permute.xlu0 11
        %584 = vperm.xlu0 %583, %v119
        %v585 = vpop.permute.xlu0 %584
        %587 = vset.pattern.permute.xlu0 11
        %588 = vperm.xlu0 %587, %v120
        %v589 = vpop.permute.xlu0 %588
        %591 = vset.pattern.permute.xlu0 11
        %592 = vperm.xlu0 %591, %v121
        %v593 = vpop.permute.xlu0 %592
        %595 = vset.pattern.permute.xlu0 11
        %596 = vperm.xlu0 %595, %v122
        %v597 = vpop.permute.xlu0 %596
        %599 = vset.pattern.permute.xlu0 11
        %600 = vperm.xlu0 %599, %v123
        %v601 = vpop.permute.xlu0 %600
        %603 = vset.pattern.permute.xlu0 11
        %604 = vperm.xlu0 %603, %v124
        %v605 = vpop.permute.xlu0 %604
        %607 = vset.pattern.permute.xlu0 11
        %608 = vperm.xlu0 %607, %v125
        %v609 = vpop.permute.xlu0 %608
        %v611 = vsel %vm578, %v581, %v570
        %v612 = vsel %vm578, %v585, %v571
        %v613 = vsel %vm578, %v589, %v572
        %v614 = vsel %vm578, %v593, %v573
        %v615 = vsel %vm578, %v597, %v574
        %v616 = vsel %vm578, %v601, %v575
        %v617 = vsel %vm578, %v605, %v576
        %v618 = vsel %vm578, %v609, %v577
        %vm619 = vcmp.ge.s32.totalorder %v127, 48
        %620 = vset.pattern.permute.xlu0 12
        %621 = vperm.xlu0 %620, %v118
        %v622 = vpop.permute.xlu0 %621
        %624 = vset.pattern.permute.xlu0 12
        %625 = vperm.xlu0 %624, %v119
        %v626 = vpop.permute.xlu0 %625
        %628 = vset.pattern.permute.xlu0 12
        %629 = vperm.xlu0 %628, %v120
        %v630 = vpop.permute.xlu0 %629
        %632 = vset.pattern.permute.xlu0 12
        %633 = vperm.xlu0 %632, %v121
        %v634 = vpop.permute.xlu0 %633
        %636 = vset.pattern.permute.xlu0 12
        %637 = vperm.xlu0 %636, %v122
        %v638 = vpop.permute.xlu0 %637
        %640 = vset.pattern.permute.xlu0 12
        %641 = vperm.xlu0 %640, %v123
        %v642 = vpop.permute.xlu0 %641
        %644 = vset.pattern.permute.xlu0 12
        %645 = vperm.xlu0 %644, %v124
        %v646 = vpop.permute.xlu0 %645
        %648 = vset.pattern.permute.xlu0 12
        %649 = vperm.xlu0 %648, %v125
        %v650 = vpop.permute.xlu0 %649
        %v652 = vsel %vm619, %v622, %v611
        %v653 = vsel %vm619, %v626, %v612
        %v654 = vsel %vm619, %v630, %v613
        %v655 = vsel %vm619, %v634, %v614
        %v656 = vsel %vm619, %v638, %v615
        %v657 = vsel %vm619, %v642, %v616
        %v658 = vsel %vm619, %v646, %v617
        %v659 = vsel %vm619, %v650, %v618
        %vm660 = vcmp.ge.s32.totalorder %v127, 52
        %661 = vset.pattern.permute.xlu0 13
        %662 = vperm.xlu0 %661, %v118
        %v663 = vpop.permute.xlu0 %662
        %665 = vset.pattern.permute.xlu0 13
        %666 = vperm.xlu0 %665, %v119
        %v667 = vpop.permute.xlu0 %666
        %669 = vset.pattern.permute.xlu0 13
        %670 = vperm.xlu0 %669, %v120
        %v671 = vpop.permute.xlu0 %670
        %673 = vset.pattern.permute.xlu0 13
        %674 = vperm.xlu0 %673, %v121
        %v675 = vpop.permute.xlu0 %674
        %677 = vset.pattern.permute.xlu0 13
        %678 = vperm.xlu0 %677, %v122
        %v679 = vpop.permute.xlu0 %678
        %681 = vset.pattern.permute.xlu0 13
        %682 = vperm.xlu0 %681, %v123
        %v683 = vpop.permute.xlu0 %682
        %685 = vset.pattern.permute.xlu0 13
        %686 = vperm.xlu0 %685, %v124
        %v687 = vpop.permute.xlu0 %686
        %689 = vset.pattern.permute.xlu0 13
        %690 = vperm.xlu0 %689, %v125
        %v691 = vpop.permute.xlu0 %690
        %v693 = vsel %vm660, %v663, %v652
        %v694 = vsel %vm660, %v667, %v653
        %v695 = vsel %vm660, %v671, %v654
        %v696 = vsel %vm660, %v675, %v655
        %v697 = vsel %vm660, %v679, %v656
        %v698 = vsel %vm660, %v683, %v657
        %v699 = vsel %vm660, %v687, %v658
        %v700 = vsel %vm660, %v691, %v659
        %vm701 = vcmp.ge.s32.totalorder %v127, 56
        %702 = vset.pattern.permute.xlu0 14
        %703 = vperm.xlu0 %702, %v118
        %v704 = vpop.permute.xlu0 %703
        %706 = vset.pattern.permute.xlu0 14
        %707 = vperm.xlu0 %706, %v119
        %v708 = vpop.permute.xlu0 %707
        %710 = vset.pattern.permute.xlu0 14
        %711 = vperm.xlu0 %710, %v120
        %v712 = vpop.permute.xlu0 %711
        %714 = vset.pattern.permute.xlu0 14
        %715 = vperm.xlu0 %714, %v121
        %v716 = vpop.permute.xlu0 %715
        %718 = vset.pattern.permute.xlu0 14
        %719 = vperm.xlu0 %718, %v122
        %v720 = vpop.permute.xlu0 %719
        %722 = vset.pattern.permute.xlu0 14
        %723 = vperm.xlu0 %722, %v123
        %v724 = vpop.permute.xlu0 %723
        %726 = vset.pattern.permute.xlu0 14
        %727 = vperm.xlu0 %726, %v124
        %v728 = vpop.permute.xlu0 %727
        %730 = vset.pattern.permute.xlu0 14
        %731 = vperm.xlu0 %730, %v125
        %v732 = vpop.permute.xlu0 %731
        %v734 = vsel %vm701, %v704, %v693
        %v735 = vsel %vm701, %v708, %v694
        %v736 = vsel %vm701, %v712, %v695
        %v737 = vsel %vm701, %v716, %v696
        %v738 = vsel %vm701, %v720, %v697
        %v739 = vsel %vm701, %v724, %v698
        %v740 = vsel %vm701, %v728, %v699
        %v741 = vsel %vm701, %v732, %v700
        %vm742 = vcmp.ge.s32.totalorder %v127, 60
        %743 = vset.pattern.permute.xlu0 15
        %744 = vperm.xlu0 %743, %v118
        %v745 = vpop.permute.xlu0 %744
        %747 = vset.pattern.permute.xlu0 15
        %748 = vperm.xlu0 %747, %v119
        %v749 = vpop.permute.xlu0 %748
        %751 = vset.pattern.permute.xlu0 15
        %752 = vperm.xlu0 %751, %v120
        %v753 = vpop.permute.xlu0 %752
        %755 = vset.pattern.permute.xlu0 15
        %756 = vperm.xlu0 %755, %v121
        %v757 = vpop.permute.xlu0 %756
        %759 = vset.pattern.permute.xlu0 15
        %760 = vperm.xlu0 %759, %v122
        %v761 = vpop.permute.xlu0 %760
        %763 = vset.pattern.permute.xlu0 15
        %764 = vperm.xlu0 %763, %v123
        %v765 = vpop.permute.xlu0 %764
        %767 = vset.pattern.permute.xlu0 15
        %768 = vperm.xlu0 %767, %v124
        %v769 = vpop.permute.xlu0 %768
        %771 = vset.pattern.permute.xlu0 15
        %772 = vperm.xlu0 %771, %v125
        %v773 = vpop.permute.xlu0 %772
        %v775 = vsel %vm742, %v745, %v734
        %v776 = vsel %vm742, %v749, %v735
        %v777 = vsel %vm742, %v753, %v736
        %v778 = vsel %vm742, %v757, %v737
        %v779 = vsel %vm742, %v761, %v738
        %v780 = vsel %vm742, %v765, %v739
        %v781 = vsel %vm742, %v769, %v740
        %v782 = vsel %vm742, %v773, %v741
        %vm783 = vcmask 523264
        %784 = vst.msk [vmem:[%s110] sm:$0xff] %vm783, %v775
        %785 = vst.msk [vmem:[%s110 + $0x8] sm:$0xff] %vm783, %v776
        %786 = vst.msk [vmem:[%s110 + $0x10] sm:$0xff] %vm783, %v777
        %787 = vst.msk [vmem:[%s110 + $0x18] sm:$0xff] %vm783, %v778
        %788 = vst.msk [vmem:[%s110 + $0x20] sm:$0xff] %vm783, %v779
        %789 = vst.msk [vmem:[%s110 + $0x28] sm:$0xff] %vm783, %v780
        %790 = vst.msk [vmem:[%s110 + $0x30] sm:$0xff] %vm783, %v781
        %791 = vst.msk [vmem:[%s110 + $0x38] sm:$0xff] %vm783, %v782
        %800 = vrot.lane.b32.xlu0 %v775, 64
        %v801 = vpop.permute.xlu0 %800
        %802 = vrot.lane.b32.xlu0 %v776, 64
        %v803 = vpop.permute.xlu0 %802
        %804 = vrot.lane.b32.xlu0 %v777, 64
        %v805 = vpop.permute.xlu0 %804
        %806 = vrot.lane.b32.xlu0 %v778, 64
        %v807 = vpop.permute.xlu0 %806
        %808 = vrot.lane.b32.xlu0 %v779, 64
        %v809 = vpop.permute.xlu0 %808
        %810 = vrot.lane.b32.xlu0 %v780, 64
        %v811 = vpop.permute.xlu0 %810
        %812 = vrot.lane.b32.xlu0 %v781, 64
        %v813 = vpop.permute.xlu0 %812
        %814 = vrot.lane.b32.xlu0 %v782, 64
        %v815 = vpop.permute.xlu0 %814
        %vm824 = vcmask 1048064
        %825 = vst.msk [vmem:[%s110] sm:$0xff] %vm824, %v801
        %826 = vst.msk [vmem:[%s110 + $0x8] sm:$0xff] %vm824, %v803
        %827 = vst.msk [vmem:[%s110 + $0x10] sm:$0xff] %vm824, %v805
        %828 = vst.msk [vmem:[%s110 + $0x18] sm:$0xff] %vm824, %v807
        %829 = vst.msk [vmem:[%s110 + $0x20] sm:$0xff] %vm824, %v809
        %830 = vst.msk [vmem:[%s110 + $0x28] sm:$0xff] %vm824, %v811
        %831 = vst.msk [vmem:[%s110 + $0x30] sm:$0xff] %vm824, %v813
        %832 = vst.msk [vmem:[%s110 + $0x38] sm:$0xff] %vm824, %v815
        %s833 = sand.u32 %s49, 1
        %s834 = scalar_lea.sflag [#allocation3], %s833
        %s835 = sand.u32 %s49, 1
        %s836 = smul.addr %s835, 64
        %s837 = scalar_lea.vmem [#allocation2], %s836
        // Predicated region
        $region25: #{tpu_custom_call.1} parent=23 // pred_check
          %p838 = pneg %p59
        $region26: #{tpu_custom_call.1} parent=23 // pred_check_branch
          %840 = sbr.rel (%p838) target = $region28
        $region27: #{tpu_custom_call.1} parent=23 // pred_region
          %s841 = smul.u32 8, %s15
          %s843 = ssub.s32 1024, 1024
          %844 = vsyncadd %s834, %s843
          %s845 = smul.addr %s841, 128
          %s846 = scalar_lea.hbm %s1, %s845
          %s847 = sshll.u32 %s837, 4
          %s848 = int_to_ptr.vmem [resolvable:$true] %s847
          %853 = dma.vmem_to_hbm [thread:$0]  %s848, 1024, %s846, %s834, 128, 128, 8
        $region28: #{tpu_custom_call.1} parent=23 // pred_fallthru
          _
      $region24: #{tpu_custom_call.1} parent=5 // pred_fallthru
        _
      %p854 = scmp.le.s32.totalorder 2, %s10
      // Predicated region
      $region29: #{tpu_custom_call.1} parent=5 // pred_check
        %p855 = pneg %p854
      $region30: #{tpu_custom_call.1} parent=5 // pred_check_branch
        %857 = sbr.rel (%p855) target = $region32
      $region31: #{tpu_custom_call.1} parent=5 // pred_region
        %s858 = ssub.s32 %s10, 2
        // Predicated region
        $region33: #{tpu_custom_call.1} parent=31 // pred_check
          %p859 = pneg %p65
        $region34: #{tpu_custom_call.1} parent=31 // pred_check_branch
          %861 = sbr.rel (%p859) target = $region36
        $region35: #{tpu_custom_call.1} parent=31 // pred_region
          %s862 = sand.u32 %s50, 1
          %s863 = scalar_lea.sflag [#allocation3], %s862
          %s864 = sand.u32 %s50, 1
          %s865 = smul.addr %s864, 64
          %s866 = scalar_lea.vmem [#allocation2], %s865
          %867 = dma.done %s863, 1024
        $region36: #{tpu_custom_call.1} parent=31 // pred_fallthru
          _
      $region32: #{tpu_custom_call.1} parent=5 // pred_fallthru
        _
    $region6: #{tpu_custom_call.1} parent=1 // loop_footer
      %s14 = sadd.s32 1, %s10
    $region7: #{tpu_custom_call.1} parent=1 // loop_footer_branch
      %9 = sbr.rel target = $region3
    $region8: #{tpu_custom_call.1} parent=1 // loop_exit
      _
    %868 = vsyncpa [#allocation3], 1
    %s869 = scalar_lea.sflag [#allocation3], 1
    %870 = vsyncpa %s869, 1

</llo_original>
